<compile_context>
chip_gen: v7x
topology: tpu7x:2x2x1
jax: 0.10.0
libtpu: 0.0.40
codegen_flags: <defaults>
</compile_context>

<pallas_src>
import functools

import jax
import jax.numpy as jnp
from jax.experimental import pallas as pl
from jax.experimental.pallas import tpu as pltpu


def _nim_forward_kernel(x_ref, w1_ref, b1_ref, w2_ref, b2_ref, w3_ref, b3_ref,
                        o_ref):
    """One sigma-column tile: full MLP + softmax(axis=0) for that tile.

    Layers 1/2 are recomputed per tile (they are tiny); layer 3 and the
    softmax only touch this tile's columns, so no cross-tile state is needed.
    """
    x = x_ref[...]                                   # (B, in)
    b1 = b1_ref[...]                                 # (1, H)  hoisted loads
    b2 = b2_ref[...]                                 # (1, H)
    b3 = b3_ref[...]                                 # (1, TN)

    # l1 + ReLU
    h = jnp.dot(x, w1_ref[...], preferred_element_type=jnp.float32) + b1
    h = jnp.maximum(h, 0.0)

    # l2 + ReLU
    h = jnp.dot(h, w2_ref[...], preferred_element_type=jnp.float32) + b2
    h = jnp.maximum(h, 0.0)

    # l3 (this tile's columns) + ReLU
    h = jnp.dot(h, w3_ref[...], preferred_element_type=jnp.float32) + b3
    h = jnp.maximum(h, 0.0)                          # (B, TN)

    # nn.Softmax(0): softmax along the batch axis, independent per column.
    m = jnp.max(h, axis=0, keepdims=True)            # (1, TN)
    e = jnp.exp(h - m)                               # (B, TN)
    s = jnp.sum(e, axis=0, keepdims=True)            # (1, TN)
    inv = pl.reciprocal(s)                           # exact; approx=True would
    o_ref[...] = (e * inv).astype(o_ref.dtype)       # need a looser tolerance


def nim_forward(x, params, *, tn=128):
    """x: (B, gamesize+1) float32. params: dict of transposed weights/biases.

    tn: sigma tile width (multiple of 128 for lane-dense stores). The whole
    batch stays in one block since softmax reduces over the batch axis.
    """
    w1t, b1, w2t, b2, w3t, b3 = (params["w1t"], params["b1"], params["w2t"],
                                 params["b2"], params["w3t"], params["b3"])
    B = x.shape[0]
    H = w1t.shape[1]
    sigma = w3t.shape[1]

    # Pad sigma up to a multiple of tn (>= 128) so the output is lane-dense.
    # Padded columns compute relu(0) -> softmax of zeros -> 1/B; sliced off.
    sigma_pad = pl.cdiv(sigma, tn) * tn
    if sigma_pad != sigma:
        w3t = jnp.pad(w3t, ((0, 0), (0, sigma_pad - sigma)))
        b3 = jnp.pad(b3, ((0, 0), (0, sigma_pad - sigma)))

    full = lambda a: pl.BlockSpec(a.shape, lambda j: tuple(0 for _ in a.shape))

    out = pl.pallas_call(
        _nim_forward_kernel,
        out_shape=jax.ShapeDtypeStruct((B, sigma_pad), jnp.float32),
        grid=(sigma_pad // tn,),
        in_specs=[
            full(x),                                       # (B, in)
            full(w1t), full(b1),                           # (in, H), (1, H)
            full(w2t), full(b2),                           # (H, H),  (1, H)
            pl.BlockSpec((H, tn), lambda j: (0, j)),       # w3 column slab
            pl.BlockSpec((1, tn), lambda j: (0, j)),       # b3 column slab
        ],
        out_specs=pl.BlockSpec((B, tn), lambda j: (0, j)),
        compiler_params=pltpu.CompilerParams(
            dimension_semantics=("parallel",)),            # megacore on v7x
    )(x, w1t, b1, w2t, b2, w3t, b3)

    return out[:, :sigma]


def init_params(gamesize, key):
    """Deterministic init mimicking nn.Linear's U(-1/sqrt(fan_in), 1/sqrt(fan_in))."""
    sigma = gamesize * (gamesize + 1) // 2
    dims = [(gamesize + 1, 2 * gamesize),
            (2 * gamesize, 2 * gamesize),
            (2 * gamesize, sigma)]
    params = {}
    for i, (fan_in, fan_out) in enumerate(dims, start=1):
        key, kw, kb = jax.random.split(key, 3)
        bound = 1.0 / jnp.sqrt(jnp.float32(fan_in))
        # stored already transposed: (in_features, out_features)
        params[f"w{i}t"] = jax.random.uniform(
            kw, (fan_in, fan_out), jnp.float32, -bound, bound)
        # bias kept 2-D (1, out) for clean broadcasting on TPU
        params[f"b{i}"] = jax.random.uniform(
            kb, (1, fan_out), jnp.float32, -bound, bound)
    return params


def nim_forward_reference(x, params):
    """Pure-JAX reference for correctness checking."""
    h = jnp.maximum(x @ params["w1t"] + params["b1"], 0.0)
    h = jnp.maximum(h @ params["w2t"] + params["b2"], 0.0)
    h = jnp.maximum(h @ params["w3t"] + params["b3"], 0.0)
    return jax.nn.softmax(h, axis=0)


if __name__ == "__main__":
    gamesize = 7                      # -> in=8, hidden=14, sigma=28
    batch = 8                         # softmax(0) groups states within a batch
    key = jax.random.PRNGKey(0)
    key, kx = jax.random.split(key)

    params = init_params(gamesize, key)
    # Nim states are small non-negative integers + player id; ints cast to f32.
    x = jax.random.randint(kx, (batch, gamesize + 1), 0, gamesize + 1).astype(
        jnp.float32)

    out = jax.block_until_ready(nim_forward(x, params))
    ref = jax.block_until_ready(nim_forward_reference(x, params))

    assert out.shape == (batch, gamesize * (gamesize + 1) // 2)
    assert jnp.allclose(out, ref, atol=1e-5, rtol=1e-5), "mismatch vs reference"
    print("KERNEL_OK")
</pallas_src>

<mosaic_0001>
module attributes {stable_mosaic.version = 11 : i64} {
  func.func @_nim_forward_kernel(%arg0: i32, %arg1: memref<8x8xf32, #tpu.memory_space<vmem>>, %arg2: memref<8x14xf32, #tpu.memory_space<vmem>>, %arg3: memref<1x14xf32, #tpu.memory_space<vmem>>, %arg4: memref<14x14xf32, #tpu.memory_space<vmem>>, %arg5: memref<1x14xf32, #tpu.memory_space<vmem>>, %arg6: memref<14x128xf32, #tpu.memory_space<vmem>>, %arg7: memref<1x128xf32, #tpu.memory_space<vmem>>, %arg8: memref<8x128xf32, #tpu.memory_space<vmem>>) attributes {dimension_semantics = [#tpu.dimension_semantics<parallel>], iteration_bounds = array<i64: 1>, scalar_prefetch = 0 : i64, scratch_operands = 0 : i64, tpu.core_type = #tpu.core_type<tc>, window_params = [{pipeline_mode = #tpu.pipeline_mode<synchronous>, transform_indices = @transform_0, window_bounds = array<i64: 8, 8>}, {pipeline_mode = #tpu.pipeline_mode<synchronous>, transform_indices = @transform_1, window_bounds = array<i64: 8, 14>}, {pipeline_mode = #tpu.pipeline_mode<synchronous>, transform_indices = @transform_2, window_bounds = array<i64: 1, 14>}, {pipeline_mode = #tpu.pipeline_mode<synchronous>, transform_indices = @transform_3, window_bounds = array<i64: 14, 14>}, {pipeline_mode = #tpu.pipeline_mode<synchronous>, transform_indices = @transform_4, window_bounds = array<i64: 1, 14>}, {transform_indices = @transform_5, window_bounds = array<i64: 14, 128>}, {transform_indices = @transform_6, window_bounds = array<i64: 1, 128>}, {transform_indices = @transform_7, window_bounds = array<i64: 8, 128>}]} {
    %c0 = arith.constant 0 : index
    %c0_0 = arith.constant 0 : index
    %0 = vector.load %arg1[%c0, %c0_0] : memref<8x8xf32, #tpu.memory_space<vmem>>, vector<8x8xf32>
    %c0_1 = arith.constant 0 : index
    %c0_2 = arith.constant 0 : index
    %1 = vector.load %arg3[%c0_1, %c0_2] : memref<1x14xf32, #tpu.memory_space<vmem>>, vector<1x14xf32>
    %c0_3 = arith.constant 0 : index
    %c0_4 = arith.constant 0 : index
    %2 = vector.load %arg5[%c0_3, %c0_4] : memref<1x14xf32, #tpu.memory_space<vmem>>, vector<1x14xf32>
    %c0_5 = arith.constant 0 : index
    %c0_6 = arith.constant 0 : index
    %3 = vector.load %arg7[%c0_5, %c0_6] : memref<1x128xf32, #tpu.memory_space<vmem>>, vector<1x128xf32>
    %c0_7 = arith.constant 0 : index
    %c0_8 = arith.constant 0 : index
    %4 = vector.load %arg2[%c0_7, %c0_8] : memref<8x14xf32, #tpu.memory_space<vmem>>, vector<8x14xf32>
    %cst = arith.constant dense<0.000000e+00> : vector<8x14xf32>
    %5 = tpu.matmul %0, %4, %cst {dimension_numbers = #tpu.dot_dimension_numbers<[1], [0], [0], [1], [0, 0, 1, 1], [], []>} : vector<8x8xf32>, vector<8x14xf32>, vector<8x14xf32> -> vector<8x14xf32>
    %6 = vector.broadcast %1 : vector<1x14xf32> to vector<8x14xf32>
    %7 = arith.addf %5, %6 : vector<8x14xf32>
    %cst_9 = arith.constant 0.000000e+00 : f32
    %8 = vector.broadcast %cst_9 : f32 to vector<8x14xf32>
    %9 = arith.maximumf %7, %8 : vector<8x14xf32>
    %c0_10 = arith.constant 0 : index
    %c0_11 = arith.constant 0 : index
    %10 = vector.load %arg4[%c0_10, %c0_11] : memref<14x14xf32, #tpu.memory_space<vmem>>, vector<14x14xf32>
    %cst_12 = arith.constant dense<0.000000e+00> : vector<8x14xf32>
    %11 = tpu.matmul %9, %10, %cst_12 {dimension_numbers = #tpu.dot_dimension_numbers<[1], [0], [0], [1], [0, 0, 1, 1], [], []>} : vector<8x14xf32>, vector<14x14xf32>, vector<8x14xf32> -> vector<8x14xf32>
    %12 = vector.broadcast %2 : vector<1x14xf32> to vector<8x14xf32>
    %13 = arith.addf %11, %12 : vector<8x14xf32>
    %cst_13 = arith.constant 0.000000e+00 : f32
    %14 = vector.broadcast %cst_13 : f32 to vector<8x14xf32>
    %15 = arith.maximumf %13, %14 : vector<8x14xf32>
    %c0_14 = arith.constant 0 : index
    %c0_15 = arith.constant 0 : index
    %16 = vector.load %arg6[%c0_14, %c0_15] : memref<14x128xf32, #tpu.memory_space<vmem>>, vector<14x128xf32>
    %cst_16 = arith.constant dense<0.000000e+00> : vector<8x128xf32>
    %17 = tpu.matmul %15, %16, %cst_16 {dimension_numbers = #tpu.dot_dimension_numbers<[1], [0], [0], [1], [0, 0, 1, 1], [], []>} : vector<8x14xf32>, vector<14x128xf32>, vector<8x128xf32> -> vector<8x128xf32>
    %18 = vector.broadcast %3 : vector<1x128xf32> to vector<8x128xf32>
    %19 = arith.addf %17, %18 : vector<8x128xf32>
    %cst_17 = arith.constant 0.000000e+00 : f32
    %20 = vector.broadcast %cst_17 : f32 to vector<8x128xf32>
    %21 = arith.maximumf %19, %20 : vector<8x128xf32>
    %cst_18 = arith.constant dense<0xFF800000> : vector<128xf32>
    %22 = vector.multi_reduction <maximumf>, %21, %cst_18 [0] : vector<8x128xf32> to vector<128xf32>
    %23 = vector.shape_cast %22 : vector<128xf32> to vector<1x128xf32>
    %24 = vector.broadcast %23 : vector<1x128xf32> to vector<8x128xf32>
    %25 = arith.subf %21, %24 : vector<8x128xf32>
    %26 = math.exp %25 : vector<8x128xf32>
    %cst_19 = arith.constant dense<0.000000e+00> : vector<128xf32>
    %27 = vector.multi_reduction <add>, %26, %cst_19 [0] : vector<8x128xf32> to vector<128xf32>
    %28 = vector.shape_cast %27 : vector<128xf32> to vector<1x128xf32>
    %29 = tpu.reciprocal %28 : vector<1x128xf32> -> vector<1x128xf32>
    %30 = vector.broadcast %29 : vector<1x128xf32> to vector<8x128xf32>
    %31 = arith.mulf %26, %30 : vector<8x128xf32>
    %c0_20 = arith.constant 0 : index
    %c0_21 = arith.constant 0 : index
    %32 = vector.load %arg8[%c0_20, %c0_21] : memref<8x128xf32, #tpu.memory_space<vmem>>, vector<8x128xf32>
    tpu.vector_store %arg8[%c0_20, %c0_21], %31 {strides = array<i32>} : memref<8x128xf32, #tpu.memory_space<vmem>>, vector<8x128xf32>,
    return
  }
  func.func @transform_0(%arg0: i32) -> (i32, i32) {
    %c0_i32 = arith.constant 0 : i32
    %c0_i32_0 = arith.constant 0 : i32
    %c0_i32_1 = arith.constant 0 : i32
    return %c0_i32, %c0_i32_0 : i32, i32
  }
  func.func @transform_1(%arg0: i32) -> (i32, i32) {
    %c0_i32 = arith.constant 0 : i32
    %c0_i32_0 = arith.constant 0 : i32
    %c0_i32_1 = arith.constant 0 : i32
    return %c0_i32, %c0_i32_0 : i32, i32
  }
  func.func @transform_2(%arg0: i32) -> (i32, i32) {
    %c0_i32 = arith.constant 0 : i32
    %c0_i32_0 = arith.constant 0 : i32
    %c0_i32_1 = arith.constant 0 : i32
    return %c0_i32, %c0_i32_0 : i32, i32
  }
  func.func @transform_3(%arg0: i32) -> (i32, i32) {
    %c0_i32 = arith.constant 0 : i32
    %c0_i32_0 = arith.constant 0 : i32
    %c0_i32_1 = arith.constant 0 : i32
    return %c0_i32, %c0_i32_0 : i32, i32
  }
  func.func @transform_4(%arg0: i32) -> (i32, i32) {
    %c0_i32 = arith.constant 0 : i32
    %c0_i32_0 = arith.constant 0 : i32
    %c0_i32_1 = arith.constant 0 : i32
    return %c0_i32, %c0_i32_0 : i32, i32
  }
  func.func @transform_5(%arg0: i32) -> (i32, i32) {
    %c0_i32 = arith.constant 0 : i32
    %c0_i32_0 = arith.constant 0 : i32
    return %c0_i32, %arg0 : i32, i32
  }
  func.func @transform_6(%arg0: i32) -> (i32, i32) {
    %c0_i32 = arith.constant 0 : i32
    %c0_i32_0 = arith.constant 0 : i32
    return %c0_i32, %arg0 : i32, i32
  }
  func.func @transform_7(%arg0: i32) -> (i32, i32) {
    %c0_i32 = arith.constant 0 : i32
    %c0_i32_0 = arith.constant 0 : i32
    return %c0_i32, %arg0 : i32, i32
  }
}

</mosaic_0001>

<llo_original>
// kernel: tpu_custom_call.1
$region0: #{tpu_custom_call.1}
  #allocation0 [shape = 'u32[]', space=smem, size = 0x4, offset = 0x4, fixed_abs, tag = 'smem constant byte address 0x4 - core index']
  #allocation1 [shape = 'u32[144,128]{1,0:T(1,128)}', space=vmem, size = 0x12000, scoped, tag = 'internal scratch']
  %s0 = inlined_call_operand.hbm [shape: f32[8,8], index: 0, kind: input, shape index: {}]
  %s1 = inlined_call_operand.hbm [shape: f32[8,14], index: 1, kind: input, shape index: {}]
  %s2 = inlined_call_operand.vmem [shape: f32[1,14], index: 2, kind: input, shape index: {}]
  %s3 = inlined_call_operand.hbm [shape: f32[14,14], index: 3, kind: input, shape index: {}]
  %s4 = inlined_call_operand.vmem [shape: f32[1,14], index: 4, kind: input, shape index: {}]
  %s5 = inlined_call_operand.vmem [shape: f32[14,128], index: 5, kind: input, shape index: {}]
  %s6 = inlined_call_operand.vmem [shape: f32[1,128], index: 6, kind: input, shape index: {}]
  %s7 = inlined_call_operand.hbm [shape: f32[8,128], index: 7, kind: output, shape index: {}]
  %s8 = sld [smem:[#allocation0]]
  $region50: #{tpu_custom_call.1} parent=0
    _
  %s10 = ssub.s32 1, %s8
  %s11 = scalar_select 0, %s10, %s8
  $region1: #{tpu_custom_call.1} parent=0
    #allocation2 [shape = 'u8[4096]{0}', space=vmem, size = 0x1000, scoped, tag = 'input window, operand 0, single buffered']
    #allocation3 [shape = 's32[1]{0}', space=sflag, size = 0x4, scoped, tag = 'scoped memory for tpu_custom_call.1']
    #allocation4 [shape = 's32[1]{0}', space=sflag, size = 0x4, scoped, tag = 'scoped memory for tpu_custom_call.1']
    #allocation5 [shape = 'u8[4096]{0}', space=vmem, size = 0x1000, scoped, tag = 'input window, operand 1, single buffered']
    #allocation6 [shape = 's32[1]{0}', space=sflag, size = 0x4, scoped, tag = 'scoped memory for tpu_custom_call.1']
    #allocation7 [shape = 'u8[8192]{0}', space=vmem, size = 0x2000, scoped, tag = 'input window, operand 3, single buffered']
    #allocation8 [shape = 'u8[4096]{0}', space=vmem, size = 0x1000, scoped, tag = 'output window, operand 0, single buffered']
    %12 = vsyncpa [#allocation3], 0
    %13 = vsyncpa [#allocation6], 0
    %14 = vsyncpa [#allocation4], 0
    // Predicated region
    $region2: #{tpu_custom_call.1} parent=1 // pred_check
      _
    $region3: #{tpu_custom_call.1} parent=1 // pred_check_branch
      %16 = sbr.rel (0) target = $region5
    $region4: #{tpu_custom_call.1} parent=1 // pred_region
      %s18 = ssub.s32 128, 128
      %19 = vsyncadd [#allocation3], %s18
      %s21 = sshll.u32 [#allocation2], 4
      %s22 = int_to_ptr.vmem [resolvable:$true] %s21
      %24 = dma.hbm_to_vmem [thread:$0]  %s0, 128, %s22, [#allocation3]
    $region5: #{tpu_custom_call.1} parent=1 // pred_fallthru
      _
    // Predicated region
    $region6: #{tpu_custom_call.1} parent=1 // pred_check
      _
    $region7: #{tpu_custom_call.1} parent=1 // pred_check_branch
      %26 = sbr.rel (0) target = $region9
    $region8: #{tpu_custom_call.1} parent=1 // pred_region
      %s28 = ssub.s32 128, 128
      %29 = vsyncadd [#allocation6], %s28
      %s31 = sshll.u32 [#allocation5], 4
      %s32 = int_to_ptr.vmem [resolvable:$true] %s31
      %34 = dma.hbm_to_vmem [thread:$0]  %s1, 128, %s32, [#allocation6]
    $region9: #{tpu_custom_call.1} parent=1 // pred_fallthru
      _
    // Predicated region
    $region10: #{tpu_custom_call.1} parent=1 // pred_check
      _
    $region11: #{tpu_custom_call.1} parent=1 // pred_check_branch
      %36 = sbr.rel (0) target = $region13
    $region12: #{tpu_custom_call.1} parent=1 // pred_region
      _
    $region13: #{tpu_custom_call.1} parent=1 // pred_fallthru
      _
    // Predicated region
    $region14: #{tpu_custom_call.1} parent=1 // pred_check
      _
    $region15: #{tpu_custom_call.1} parent=1 // pred_check_branch
      %38 = sbr.rel (0) target = $region17
    $region16: #{tpu_custom_call.1} parent=1 // pred_region
      %s40 = ssub.s32 256, 256
      %41 = vsyncadd [#allocation6], %s40
      %s42 = sshll.u32 [#allocation7], 4
      %s43 = int_to_ptr.vmem [resolvable:$true] %s42
      %48 = dma.hbm_to_vmem [thread:$0]  %s3, 256, %s43, [#allocation6], 128, 128, 8
    $region17: #{tpu_custom_call.1} parent=1 // pred_fallthru
      _
    // Predicated region
    $region18: #{tpu_custom_call.1} parent=1 // pred_check
      _
    $region19: #{tpu_custom_call.1} parent=1 // pred_check_branch
      %50 = sbr.rel (0) target = $region21
    $region20: #{tpu_custom_call.1} parent=1 // pred_region
      _
    $region21: #{tpu_custom_call.1} parent=1 // pred_fallthru
      _
    // Predicated region
    $region22: #{tpu_custom_call.1} parent=1 // pred_check
      _
    $region23: #{tpu_custom_call.1} parent=1 // pred_check_branch
      %52 = sbr.rel (0) target = $region25
    $region24: #{tpu_custom_call.1} parent=1 // pred_region
      _
    $region25: #{tpu_custom_call.1} parent=1 // pred_fallthru
      _
    // Predicated region
    $region26: #{tpu_custom_call.1} parent=1 // pred_check
      _
    $region27: #{tpu_custom_call.1} parent=1 // pred_check_branch
      %54 = sbr.rel (0) target = $region29
    $region28: #{tpu_custom_call.1} parent=1 // pred_region
      _
    $region29: #{tpu_custom_call.1} parent=1 // pred_fallthru
      _
    // Predicated region
    $region30: #{tpu_custom_call.1} parent=1 // pred_check
      _
    $region31: #{tpu_custom_call.1} parent=1 // pred_check_branch
      %56 = sbr.rel (0) target = $region33
    $region32: #{tpu_custom_call.1} parent=1 // pred_region
      %57 = dma.done [#allocation3], 128
    $region33: #{tpu_custom_call.1} parent=1 // pred_fallthru
      _
    // Predicated region
    $region34: #{tpu_custom_call.1} parent=1 // pred_check
      _
    $region35: #{tpu_custom_call.1} parent=1 // pred_check_branch
      %59 = sbr.rel (0) target = $region37
    $region36: #{tpu_custom_call.1} parent=1 // pred_region
      %60 = dma.done [#allocation6], 128
    $region37: #{tpu_custom_call.1} parent=1 // pred_fallthru
      _
    // Predicated region
    $region38: #{tpu_custom_call.1} parent=1 // pred_check
      _
    $region39: #{tpu_custom_call.1} parent=1 // pred_check_branch
      %62 = sbr.rel (0) target = $region41
    $region40: #{tpu_custom_call.1} parent=1 // pred_region
      %63 = dma.done [#allocation6], 256
    $region41: #{tpu_custom_call.1} parent=1 // pred_fallthru
      _
    %v64 = vld [vmem:[#allocation2] sm:$0xff]
    %v65 = vld [vmem:[%s2] sm:$0x1]
    %v66 = vld [vmem:[%s4] sm:$0x1]
    %v67 = vld [vmem:[%s6] sm:$0x1]
    %v68 = vld [vmem:[#allocation5] sm:$0xff]
    %v70 = vlaneseq
    %v71 = vshrl.u32 %v70, 7
    %v72 = vsub.s32 0, %v71
    %v73 = vrot.slane %v65, %v72
    %vm75 = vcmask 64512
    %v77 = vsel %vm75, %v64, 0
    %79 = vmatprep.subr.mxu0 0.0
    %80 = vmatpush1.msra.mxu0 %v68
    %81 = vmatprep.subr.mxu0 0.0
    %82 = vmatpush1.msra.mxu0 0.0
    %83 = vmatprep.subr.mxu0 0.0
    %84 = vmatpush1.msra.mxu0 0.0
    %85 = vmatprep.subr.mxu0 0.0
    %86 = vmatpush1.msra.mxu0 0.0
    %87 = vmatprep.subr.mxu0 0.0
    %88 = vmatpush1.msra.mxu0 0.0
    %89 = vmatprep.subr.mxu0 0.0
    %90 = vmatpush1.msra.mxu0 0.0
    %91 = vmatprep.subr.mxu0 0.0
    %92 = vmatpush1.msra.mxu0 0.0
    %93 = vmatprep.subr.mxu0 0.0
    %94 = vmatpush1.msra.mxu0 0.0
    %95 = vmatprep.subr.mxu0 0.0
    %96 = vmatpush1.msra.mxu0 0.0
    %97 = vmatprep.subr.mxu0 0.0
    %98 = vmatpush1.msra.mxu0 0.0
    %99 = vmatprep.subr.mxu0 0.0
    %100 = vmatpush1.msra.mxu0 0.0
    %101 = vmatprep.subr.mxu0 0.0
    %102 = vmatpush1.msra.mxu0 0.0
    %103 = vmatprep.subr.mxu0 0.0
    %104 = vmatpush1.msra.mxu0 0.0
    %105 = vmatprep.subr.mxu0 0.0
    %106 = vmatpush1.msra.mxu0 0.0
    %107 = vmatprep.subr.mxu0 0.0
    %108 = vmatpush1.msra.mxu0 0.0
    %109 = vmatprep.subr.mxu0 0.0
    %110 = vmatpush1.msra.mxu0 0.0
    %111 = vmatprep.subr.mxu0 0.0
    %112 = vmatpush1.msra.mxu0 0.0
    %113 = vmatprep.subr.mxu0 0.0
    %114 = vmatpush1.msra.mxu0 0.0
    %115 = vmatprep.subr.mxu0 0.0
    %116 = vmatpush1.msra.mxu0 0.0
    %117 = vmatprep.subr.mxu0 0.0
    %118 = vmatpush1.msra.mxu0 0.0
    %119 = vmatprep.subr.mxu0 0.0
    %120 = vmatpush1.msra.mxu0 0.0
    %121 = vmatprep.subr.mxu0 0.0
    %122 = vmatpush1.msra.mxu0 0.0
    %123 = vmatprep.subr.mxu0 0.0
    %124 = vmatpush1.msra.mxu0 0.0
    %125 = vmatprep.subr.mxu0 0.0
    %126 = vmatpush1.msra.mxu0 0.0
    %127 = vmatprep.subr.mxu0 0.0
    %128 = vmatpush1.msra.mxu0 0.0
    %129 = vmatprep.subr.mxu0 0.0
    %130 = vmatpush1.msra.mxu0 0.0
    %131 = vmatprep.subr.mxu0 0.0
    %132 = vmatpush1.msra.mxu0 0.0
    %133 = vmatprep.subr.mxu0 0.0
    %134 = vmatpush1.msra.mxu0 0.0
    %135 = vmatprep.subr.mxu0 0.0
    %136 = vmatpush1.msra.mxu0 0.0
    %137 = vmatprep.subr.mxu0 0.0
    %138 = vmatpush1.msra.mxu0 0.0
    %139 = vmatprep.subr.mxu0 0.0
    %140 = vmatpush1.msra.mxu0 0.0
    %141 = vmatprep.subr.mxu0 0.0
    %142 = vmatpush1.msra.mxu0 0.0
    %143 = vmatprep.mubr.f32.mxu0 0.0
    %144 = vmatmul.mubr.f32.gmra.mrb[0].mxu0 %v77
    %v145 = vpop.f32.mrb[0].mxu0
    %v146 = vadd.f32 %v73, %v145
    %v147 = vpop.f32.mrb[0].mxu0
    %148 = vdwg.mxu0
    %v149 = vmax.f32 %v146, 0.0
    %v150 = vld [vmem:[#allocation7] sm:$0xff]
    %v151 = vld [vmem:[#allocation7 + $0x8] sm:$0x3f]
    %v153 = vlaneseq
    %v154 = vshrl.u32 %v153, 7
    %v155 = vsub.s32 0, %v154
    %v156 = vrot.slane %v66, %v155
    %vm158 = vcmask 113664
    %v160 = vsel %vm158, %v149, 0
    %vm162 = vcmask 1045504
    %v164 = vsel %vm162, %v151, 0
    %166 = vmatprep.subr.mxu0 0.0
    %167 = vmatpush1.msra.mxu0 %v150
    %168 = vmatprep.subr.mxu0 0.0
    %169 = vmatpush1.msra.mxu0 %v164
    %170 = vmatprep.subr.mxu0 0.0
    %171 = vmatpush1.msra.mxu0 0.0
    %172 = vmatprep.subr.mxu0 0.0
    %173 = vmatpush1.msra.mxu0 0.0
    %174 = vmatprep.subr.mxu0 0.0
    %175 = vmatpush1.msra.mxu0 0.0
    %176 = vmatprep.subr.mxu0 0.0
    %177 = vmatpush1.msra.mxu0 0.0
    %178 = vmatprep.subr.mxu0 0.0
    %179 = vmatpush1.msra.mxu0 0.0
    %180 = vmatprep.subr.mxu0 0.0
    %181 = vmatpush1.msra.mxu0 0.0
    %182 = vmatprep.subr.mxu0 0.0
    %183 = vmatpush1.msra.mxu0 0.0
    %184 = vmatprep.subr.mxu0 0.0
    %185 = vmatpush1.msra.mxu0 0.0
    %186 = vmatprep.subr.mxu0 0.0
    %187 = vmatpush1.msra.mxu0 0.0
    %188 = vmatprep.subr.mxu0 0.0
    %189 = vmatpush1.msra.mxu0 0.0
    %190 = vmatprep.subr.mxu0 0.0
    %191 = vmatpush1.msra.mxu0 0.0
    %192 = vmatprep.subr.mxu0 0.0
    %193 = vmatpush1.msra.mxu0 0.0
    %194 = vmatprep.subr.mxu0 0.0
    %195 = vmatpush1.msra.mxu0 0.0
    %196 = vmatprep.subr.mxu0 0.0
    %197 = vmatpush1.msra.mxu0 0.0
    %198 = vmatprep.subr.mxu0 0.0
    %199 = vmatpush1.msra.mxu0 0.0
    %200 = vmatprep.subr.mxu0 0.0
    %201 = vmatpush1.msra.mxu0 0.0
    %202 = vmatprep.subr.mxu0 0.0
    %203 = vmatpush1.msra.mxu0 0.0
    %204 = vmatprep.subr.mxu0 0.0
    %205 = vmatpush1.msra.mxu0 0.0
    %206 = vmatprep.subr.mxu0 0.0
    %207 = vmatpush1.msra.mxu0 0.0
    %208 = vmatprep.subr.mxu0 0.0
    %209 = vmatpush1.msra.mxu0 0.0
    %210 = vmatprep.subr.mxu0 0.0
    %211 = vmatpush1.msra.mxu0 0.0
    %212 = vmatprep.subr.mxu0 0.0
    %213 = vmatpush1.msra.mxu0 0.0
    %214 = vmatprep.subr.mxu0 0.0
    %215 = vmatpush1.msra.mxu0 0.0
    %216 = vmatprep.subr.mxu0 0.0
    %217 = vmatpush1.msra.mxu0 0.0
    %218 = vmatprep.subr.mxu0 0.0
    %219 = vmatpush1.msra.mxu0 0.0
    %220 = vmatprep.subr.mxu0 0.0
    %221 = vmatpush1.msra.mxu0 0.0
    %222 = vmatprep.subr.mxu0 0.0
    %223 = vmatpush1.msra.mxu0 0.0
    %224 = vmatprep.subr.mxu0 0.0
    %225 = vmatpush1.msra.mxu0 0.0
    %226 = vmatprep.subr.mxu0 0.0
    %227 = vmatpush1.msra.mxu0 0.0
    %228 = vmatprep.subr.mxu0 0.0
    %229 = vmatpush1.msra.mxu0 0.0
    %230 = vmatprep.mubr.f32.mxu0 0.0
    %231 = vmatmul.mubr.f32.gmra.mrb[0].mxu0 %v160
    %v232 = vpop.f32.mrb[0].mxu0
    %v233 = vadd.f32 %v156, %v232
    %v234 = vpop.f32.mrb[0].mxu0
    %235 = vdwg.mxu0
    %v236 = vmax.f32 %v233, 0.0
    %v237 = vld [vmem:[%s5] sm:$0xff]
    %v238 = vld [vmem:[%s5 + $0x8] sm:$0x3f]
    %v240 = vlaneseq
    %v241 = vshrl.u32 %v240, 7
    %v242 = vsub.s32 0, %v241
    %v243 = vrot.slane %v67, %v242
    %v246 = vsel %vm158, %v236, 0
    %v249 = vsel %vm162, %v238, 0
    %251 = vmatprep.subr.mxu0 0.0
    %252 = vmatpush1.msra.mxu0 %v237
    %253 = vmatprep.subr.mxu0 0.0
    %254 = vmatpush1.msra.mxu0 %v249
    %255 = vmatprep.subr.mxu0 0.0
    %256 = vmatpush1.msra.mxu0 0.0
    %257 = vmatprep.subr.mxu0 0.0
    %258 = vmatpush1.msra.mxu0 0.0
    %259 = vmatprep.subr.mxu0 0.0
    %260 = vmatpush1.msra.mxu0 0.0
    %261 = vmatprep.subr.mxu0 0.0
    %262 = vmatpush1.msra.mxu0 0.0
    %263 = vmatprep.subr.mxu0 0.0
    %264 = vmatpush1.msra.mxu0 0.0
    %265 = vmatprep.subr.mxu0 0.0
    %266 = vmatpush1.msra.mxu0 0.0
    %267 = vmatprep.subr.mxu0 0.0
    %268 = vmatpush1.msra.mxu0 0.0
    %269 = vmatprep.subr.mxu0 0.0
    %270 = vmatpush1.msra.mxu0 0.0
    %271 = vmatprep.subr.mxu0 0.0
    %272 = vmatpush1.msra.mxu0 0.0
    %273 = vmatprep.subr.mxu0 0.0
    %274 = vmatpush1.msra.mxu0 0.0
    %275 = vmatprep.subr.mxu0 0.0
    %276 = vmatpush1.msra.mxu0 0.0
    %277 = vmatprep.subr.mxu0 0.0
    %278 = vmatpush1.msra.mxu0 0.0
    %279 = vmatprep.subr.mxu0 0.0
    %280 = vmatpush1.msra.mxu0 0.0
    %281 = vmatprep.subr.mxu0 0.0
    %282 = vmatpush1.msra.mxu0 0.0
    %283 = vmatprep.subr.mxu0 0.0
    %284 = vmatpush1.msra.mxu0 0.0
    %285 = vmatprep.subr.mxu0 0.0
    %286 = vmatpush1.msra.mxu0 0.0
    %287 = vmatprep.subr.mxu0 0.0
    %288 = vmatpush1.msra.mxu0 0.0
    %289 = vmatprep.subr.mxu0 0.0
    %290 = vmatpush1.msra.mxu0 0.0
    %291 = vmatprep.subr.mxu0 0.0
    %292 = vmatpush1.msra.mxu0 0.0
    %293 = vmatprep.subr.mxu0 0.0
    %294 = vmatpush1.msra.mxu0 0.0
    %295 = vmatprep.subr.mxu0 0.0
    %296 = vmatpush1.msra.mxu0 0.0
    %297 = vmatprep.subr.mxu0 0.0
    %298 = vmatpush1.msra.mxu0 0.0
    %299 = vmatprep.subr.mxu0 0.0
    %300 = vmatpush1.msra.mxu0 0.0
    %301 = vmatprep.subr.mxu0 0.0
    %302 = vmatpush1.msra.mxu0 0.0
    %303 = vmatprep.subr.mxu0 0.0
    %304 = vmatpush1.msra.mxu0 0.0
    %305 = vmatprep.subr.mxu0 0.0
    %306 = vmatpush1.msra.mxu0 0.0
    %307 = vmatprep.subr.mxu0 0.0
    %308 = vmatpush1.msra.mxu0 0.0
    %309 = vmatprep.subr.mxu0 0.0
    %310 = vmatpush1.msra.mxu0 0.0
    %311 = vmatprep.subr.mxu0 0.0
    %312 = vmatpush1.msra.mxu0 0.0
    %313 = vmatprep.subr.mxu0 0.0
    %314 = vmatpush1.msra.mxu0 0.0
    %315 = vmatprep.mubr.f32.mxu0 0.0
    %316 = vmatmul.mubr.f32.gmra.mrb[0].mxu0 %v246
    %v317 = vpop.f32.mrb[0].mxu0
    %v318 = vadd.f32 %v243, %v317
    %v319 = vpop.f32.mrb[0].mxu0
    %320 = vdwg.mxu0
    %v321 = vmax.f32 %v318, 0.0
    %v322 = vrot.slane %v321, 4
    %v323 = vmax.f32 %v321, %v322
    %v324 = vrot.slane %v323, 2
    %v325 = vmax.f32 %v323, %v324
    %v326 = vrot.slane %v325, 1
    %v327 = vmax.f32 %v325, %v326
    %v328 = vsub.f32 %v321, %v327
    %v329 = vmul.f32 %v328, 1.442695
    %v330 = vpow.pop %v329
    %v331 = vrot.slane %v330, 4
    %v332 = vadd.f32 %v330, %v331
    %v333 = vrot.slane %v332, 2
    %v334 = vadd.f32 %v332, %v333
    %v335 = vrot.slane %v334, 1
    %v336 = vadd.f32 %v334, %v335
    %v337 = vrcp.pop %v336
    %v338 = vmul.f32 %v330, %v337
    %339 = vst [vmem:[#allocation8] sm:$0xff] %v338
    // Predicated region
    $region42: #{tpu_custom_call.1} parent=1 // pred_check
      _
    $region43: #{tpu_custom_call.1} parent=1 // pred_check_branch
      %341 = sbr.rel (0) target = $region45
    $region44: #{tpu_custom_call.1} parent=1 // pred_region
      %s343 = ssub.s32 128, 128
      %344 = vsyncadd [#allocation4], %s343
      %s346 = sshll.u32 [#allocation8], 4
      %s347 = int_to_ptr.vmem [resolvable:$true] %s346
      %349 = dma.vmem_to_hbm [thread:$0]  %s347, 128, %s7, [#allocation4]
    $region45: #{tpu_custom_call.1} parent=1 // pred_fallthru
      _
    // Predicated region
    $region46: #{tpu_custom_call.1} parent=1 // pred_check
      _
    $region47: #{tpu_custom_call.1} parent=1 // pred_check_branch
      %351 = sbr.rel (0) target = $region49
    $region48: #{tpu_custom_call.1} parent=1 // pred_region
      %352 = dma.done [#allocation4], 128
    $region49: #{tpu_custom_call.1} parent=1 // pred_fallthru
      _
    %353 = vsyncpa [#allocation3], 1
    %354 = vsyncpa [#allocation6], 1
    %355 = vsyncpa [#allocation4], 1

</llo_original>
